<compile_context>
chip_gen: v7x
topology: tpu7x:2x2x1
jax: 0.10.0
libtpu: 0.0.40
codegen_flags: <defaults>
</compile_context>

<pallas_src>
import math

import jax
import jax.numpy as jnp
from jax import lax
from jax.experimental import pallas as pl
from jax.experimental.pallas import tpu as pltpu


def attention_kernel(q_ref, k_ref, wq_ref, wk_ref, out_ref):
    # One batch element per grid step; all operands resident in VMEM.
    q = q_ref[...]      # (C_q, L)
    k = k_ref[...]      # (C_k, L)
    wq = wq_ref[...]    # (H, C_q)
    wk = wk_ref[...]    # (H, C_k)

    seq_len = q.shape[-1]
    scale = 1.0 / math.sqrt(seq_len)

    # Gram matrix over the sequence axis, contracting the last axis of both
    # operands directly (no explicit transpose).  Scale the tiny intermediate.
    gram = lax.dot_general(
        q, k, (((1,), (1,)), ((), ())),
        preferred_element_type=jnp.float32) * scale                 # (C_q, C_k)

    # Sandwich with the projection weights: scores = W_q @ gram @ W_k^T.
    tmp = jnp.dot(wq, gram, preferred_element_type=jnp.float32)     # (H, C_k)
    scores = lax.dot_general(
        tmp, wk, (((1,), (1,)), ((), ())),
        preferred_element_type=jnp.float32)                         # (H, H)

    # Numerically stable softmax over the last dim; reciprocal on the EUP.
    m = jnp.max(scores, axis=-1, keepdims=True)
    e = jnp.exp(scores - m)
    s = jnp.sum(e, axis=-1, keepdims=True)
    out_ref[...] = (e * pl.reciprocal(s, approx=False)).astype(out_ref.dtype)


def attention_weights(queries, keys, w_q, w_k):
    """queries: (B, C_q, L), keys: (B, C_k, L), w_q: (H, C_q), w_k: (H, C_k).
    Returns softmax attention weights of shape (B, H, H)."""
    B, c_q, L = queries.shape
    _, c_k, Lk = keys.shape
    assert L == Lk, "bmm in the reference requires equal query/key sequence length"
    H = w_q.shape[0]
    assert w_k.shape[0] == H

    return pl.pallas_call(
        attention_kernel,
        out_shape=jax.ShapeDtypeStruct((B, H, H), jnp.float32),
        grid=(B,),
        in_specs=[
            pl.BlockSpec((None, c_q, L), lambda b: (b, 0, 0)),
            pl.BlockSpec((None, c_k, L), lambda b: (b, 0, 0)),
            pl.BlockSpec((H, c_q), lambda b: (0, 0)),
            pl.BlockSpec((H, c_k), lambda b: (0, 0)),
        ],
        out_specs=pl.BlockSpec((None, H, H), lambda b: (b, 0, 0)),
        compiler_params=pltpu.CompilerParams(
            dimension_semantics=("parallel",)
        ),
    )(queries, keys, w_q, w_k)


def attention_weights_ref(queries, keys, w_q, w_k):
    """Pure-JAX reference mirroring the PyTorch forward exactly."""
    qp = jnp.einsum("hc,bcl->bhl", w_q, queries)         # (B, H, L)
    kp = jnp.einsum("hc,bcl->bhl", w_k, keys)            # (B, H, L)
    L = queries.shape[-1]
    scores = jnp.einsum("bil,bjl->bij", qp, kp) / math.sqrt(L)
    return jax.nn.softmax(scores, axis=-1)


if __name__ == "__main__":
    # Small shapes consistent with the module:
    #   batch=2, query_size=key_size=4 (input channels), seq L=16, num_hiddens=32
    B, C_q, C_k, L, H = 2, 4, 4, 16, 32

    key = jax.random.PRNGKey(0)
    k1, k2, k3, k4 = jax.random.split(key, 4)

    queries = jax.random.normal(k1, (B, C_q, L), dtype=jnp.float32)
    keys = jax.random.normal(k2, (B, C_k, L), dtype=jnp.float32)

    # nn.Linear(weight shape (num_hiddens, in_features), bias=False) default init.
    bound_q = 1.0 / math.sqrt(C_q)
    bound_k = 1.0 / math.sqrt(C_k)
    w_q = jax.random.uniform(k3, (H, C_q), jnp.float32, -bound_q, bound_q)
    w_k = jax.random.uniform(k4, (H, C_k), jnp.float32, -bound_k, bound_k)

    out = attention_weights(queries, keys, w_q, w_k)
    out = jax.block_until_ready(out)

    ref = attention_weights_ref(queries, keys, w_q, w_k)
    assert out.shape == (B, H, H)
    assert jnp.allclose(out, ref, atol=1e-5, rtol=1e-5), "mismatch vs JAX reference"

    print("KERNEL_OK")
</pallas_src>

<mosaic_0001>
module attributes {stable_mosaic.version = 11 : i64} {
  func.func @attention_kernel(%arg0: i32, %arg1: memref<1x4x16xf32, #tpu.memory_space<vmem>>, %arg2: memref<1x4x16xf32, #tpu.memory_space<vmem>>, %arg3: memref<32x4xf32, #tpu.memory_space<vmem>>, %arg4: memref<32x4xf32, #tpu.memory_space<vmem>>, %arg5: memref<1x32x32xf32, #tpu.memory_space<vmem>>) attributes {dimension_semantics = [#tpu.dimension_semantics<parallel>], iteration_bounds = array<i64: 2>, scalar_prefetch = 0 : i64, scratch_operands = 0 : i64, tpu.core_type = #tpu.core_type<tc>, window_params = [{transform_indices = @transform_0, window_bounds = array<i64: 1, 4, 16>}, {transform_indices = @transform_1, window_bounds = array<i64: 1, 4, 16>}, {pipeline_mode = #tpu.pipeline_mode<synchronous>, transform_indices = @transform_2, window_bounds = array<i64: 32, 4>}, {pipeline_mode = #tpu.pipeline_mode<synchronous>, transform_indices = @transform_3, window_bounds = array<i64: 32, 4>}, {transform_indices = @transform_4, window_bounds = array<i64: 1, 32, 32>}]} {
    %c0 = arith.constant 0 : index
    %c0_0 = arith.constant 0 : index
    %c0_1 = arith.constant 0 : index
    %0 = vector.load %arg1[%c0, %c0_0, %c0_1] : memref<1x4x16xf32, #tpu.memory_space<vmem>>, vector<1x4x16xf32>
    %1 = vector.shape_cast %0 : vector<1x4x16xf32> to vector<4x16xf32>
    %c0_2 = arith.constant 0 : index
    %c0_3 = arith.constant 0 : index
    %c0_4 = arith.constant 0 : index
    %2 = vector.load %arg2[%c0_2, %c0_3, %c0_4] : memref<1x4x16xf32, #tpu.memory_space<vmem>>, vector<1x4x16xf32>
    %3 = vector.shape_cast %2 : vector<1x4x16xf32> to vector<4x16xf32>
    %c0_5 = arith.constant 0 : index
    %c0_6 = arith.constant 0 : index
    %4 = vector.load %arg3[%c0_5, %c0_6] : memref<32x4xf32, #tpu.memory_space<vmem>>, vector<32x4xf32>
    %c0_7 = arith.constant 0 : index
    %c0_8 = arith.constant 0 : index
    %5 = vector.load %arg4[%c0_7, %c0_8] : memref<32x4xf32, #tpu.memory_space<vmem>>, vector<32x4xf32>
    %cst = arith.constant dense<0.000000e+00> : vector<4x4xf32>
    %6 = tpu.matmul %1, %3, %cst {dimension_numbers = #tpu.dot_dimension_numbers<[1], [1], [0], [0], [0, 0, 1, 0], [], []>} : vector<4x16xf32>, vector<4x16xf32>, vector<4x4xf32> -> vector<4x4xf32>
    %cst_9 = arith.constant 2.500000e-01 : f32
    %7 = vector.broadcast %cst_9 : f32 to vector<4x4xf32>
    %8 = arith.mulf %6, %7 : vector<4x4xf32>
    %cst_10 = arith.constant dense<0.000000e+00> : vector<32x4xf32>
    %9 = tpu.matmul %4, %8, %cst_10 {dimension_numbers = #tpu.dot_dimension_numbers<[1], [0], [0], [1], [0, 0, 1, 1], [], []>} : vector<32x4xf32>, vector<4x4xf32>, vector<32x4xf32> -> vector<32x4xf32>
    %cst_11 = arith.constant dense<0.000000e+00> : vector<32x32xf32>
    %10 = tpu.matmul %9, %5, %cst_11 {dimension_numbers = #tpu.dot_dimension_numbers<[1], [1], [0], [0], [0, 0, 1, 0], [], []>} : vector<32x4xf32>, vector<32x4xf32>, vector<32x32xf32> -> vector<32x32xf32>
    %cst_12 = arith.constant dense<0xFF800000> : vector<32xf32>
    %11 = vector.multi_reduction <maximumf>, %10, %cst_12 [1] : vector<32x32xf32> to vector<32xf32>
    %12 = vector.shape_cast %11 : vector<32xf32> to vector<32x1xf32>
    %13 = vector.broadcast %12 : vector<32x1xf32> to vector<32x32xf32>
    %14 = arith.subf %10, %13 : vector<32x32xf32>
    %15 = math.exp %14 : vector<32x32xf32>
    %cst_13 = arith.constant dense<0.000000e+00> : vector<32xf32>
    %16 = vector.multi_reduction <add>, %15, %cst_13 [1] : vector<32x32xf32> to vector<32xf32>
    %17 = vector.shape_cast %16 : vector<32xf32> to vector<32x1xf32>
    %18 = tpu.reciprocal %17 : vector<32x1xf32> -> vector<32x1xf32>
    %19 = vector.broadcast %18 : vector<32x1xf32> to vector<32x32xf32>
    %20 = arith.mulf %15, %19 : vector<32x32xf32>
    %c0_14 = arith.constant 0 : index
    %c0_15 = arith.constant 0 : index
    %c0_16 = arith.constant 0 : index
    %21 = vector.load %arg5[%c0_14, %c0_15, %c0_16] : memref<1x32x32xf32, #tpu.memory_space<vmem>>, vector<1x32x32xf32>
    %22 = vector.shape_cast %21 : vector<1x32x32xf32> to vector<32x32xf32>
    %23 = vector.shape_cast %20 : vector<32x32xf32> to vector<1x32x32xf32>
    tpu.vector_store %arg5[%c0_14, %c0_15, %c0_16], %23 {strides = array<i32>} : memref<1x32x32xf32, #tpu.memory_space<vmem>>, vector<1x32x32xf32>,
    return
  }
  func.func @transform_0(%arg0: i32) -> (i32, i32, i32) {
    %c0_i32 = arith.constant 0 : i32
    %c0_i32_0 = arith.constant 0 : i32
    %c0_i32_1 = arith.constant 0 : i32
    return %arg0, %c0_i32, %c0_i32_0 : i32, i32, i32
  }
  func.func @transform_1(%arg0: i32) -> (i32, i32, i32) {
    %c0_i32 = arith.constant 0 : i32
    %c0_i32_0 = arith.constant 0 : i32
    %c0_i32_1 = arith.constant 0 : i32
    return %arg0, %c0_i32, %c0_i32_0 : i32, i32, i32
  }
  func.func @transform_2(%arg0: i32) -> (i32, i32) {
    %c0_i32 = arith.constant 0 : i32
    %c0_i32_0 = arith.constant 0 : i32
    %c0_i32_1 = arith.constant 0 : i32
    return %c0_i32, %c0_i32_0 : i32, i32
  }
  func.func @transform_3(%arg0: i32) -> (i32, i32) {
    %c0_i32 = arith.constant 0 : i32
    %c0_i32_0 = arith.constant 0 : i32
    %c0_i32_1 = arith.constant 0 : i32
    return %c0_i32, %c0_i32_0 : i32, i32
  }
  func.func @transform_4(%arg0: i32) -> (i32, i32, i32) {
    %c0_i32 = arith.constant 0 : i32
    %c0_i32_0 = arith.constant 0 : i32
    %c0_i32_1 = arith.constant 0 : i32
    return %arg0, %c0_i32, %c0_i32_0 : i32, i32, i32
  }
}

</mosaic_0001>

<llo_original>
// kernel: tpu_custom_call.1
$region0: #{tpu_custom_call.1}
  #allocation0 [shape = 'u32[]', space=smem, size = 0x4, offset = 0x4, fixed_abs, tag = 'smem constant byte address 0x4 - core index']
  #allocation1 [shape = 'u32[144,128]{1,0:T(1,128)}', space=vmem, size = 0x12000, scoped, tag = 'internal scratch']
  %s0 = inlined_call_operand.vmem [shape: f32[2,4,16], index: 0, kind: input, shape index: {}]
  %s1 = inlined_call_operand.vmem [shape: f32[2,4,16], index: 1, kind: input, shape index: {}]
  %s2 = inlined_call_operand.vmem [shape: f32[32,4], index: 2, kind: input, shape index: {}]
  %s3 = inlined_call_operand.vmem [shape: f32[32,4], index: 3, kind: input, shape index: {}]
  %s4 = inlined_call_operand.hbm [shape: f32[2,32,32], index: 4, kind: output, shape index: {}]
  %s5 = sld [smem:[#allocation0]]
  $region49: #{tpu_custom_call.1} parent=0
    _
  %s7 = ssub.s32 1, %s5
  %s8 = scalar_select 0, %s7, %s5
  $region1: #{tpu_custom_call.1} parent=0
    #allocation2 [shape = 'u8[32768]{0}', space=vmem, size = 0x8000, scoped, tag = 'output window, operand 0']
    #allocation3 [shape = 's32[2]{0}', space=sflag, size = 0x8, scoped, tag = 'scoped memory for tpu_custom_call.1']
    %9 = vsyncpa [#allocation3], 0
    %s10 = scalar_lea.sflag [#allocation3], 1
    %11 = vsyncpa %s10, 0
    loop: start=0, step=1, limit=4
    $region2: #{tpu_custom_call.1} parent=1 // loop_pre_header
      _
    $region3: #{tpu_custom_call.1} parent=1 // loop_header
      %s13 = sphi 0, %s17
      %p14 = scmp.ge.s32.totalorder %s13, 4
      %s23 = sphi 0, %s25
      %s26 = sphi 0, %s23
      %s27 = sphi 0, %s26
      %s43 = sphi 0, %s27
      %s49 = sphi 0, %s51
      %s52 = sphi 0, %s49
      %s53 = sphi 0, %s52
      %s69 = sphi 0, %s53
      %s73 = sphi 0, %s73
      %s75 = sphi 0, %s73
      %s76 = sphi 0, %s75
      %s90 = sphi 0, %s76
      %s94 = sphi 0, %s94
      %s96 = sphi 0, %s94
      %s97 = sphi 0, %s96
      %s111 = sphi 0, %s97
      %s117 = sphi 0, %s119
      %s120 = sphi 0, %s117
      %s121 = sphi 0, %s120
      %s137 = sphi 0, %s121
    $region4: #{tpu_custom_call.1} parent=1 // loop_header_branch
      %16 = sbr.rel (%p14) target = $region8
    $region5: #{tpu_custom_call.1} parent=1 // loop_body
      %s18 = ssub.s32 %s13, 1
      %s19 = ssub.s32 %s13, 2
      %s20 = sadd.s32 %s13, 1
      %s21 = ssub.s32 %s13, %s20
      %p22 = scmp.eq.s32.totalorder %s21, 0
      %s24 = sadd.s32 %s23, 1
      %s25 = scalar_select %p22, %s23, %s24
      %p28 = pneg %p22
      %p29 = scmp.eq.s32.totalorder %s13, 1
      %p30 = por %p28, %p29
      %p31 = scmp.ne.s32.totalorder %s23, %s26
      %p32 = scmp.eq.s32.totalorder %s13, 0
      %p33 = por %p31, %p32
      %p34 = scmp.ne.s32.totalorder %s23, %s26
      %p35 = scmp.eq.s32.totalorder %s18, 1
      %p36 = por %p34, %p35
      %p37 = scmp.ne.s32.totalorder %s26, %s27
      %p38 = scmp.eq.s32.totalorder %s18, 0
      %p39 = por %p37, %p38
      %p40 = scmp.ne.s32.totalorder %s26, %s27
      %p41 = scmp.eq.s32.totalorder %s19, 1
      %p42 = por %p40, %p41
      %p44 = scmp.ne.s32.totalorder %s27, %s43
      %p45 = scmp.eq.s32.totalorder %s19, 0
      %p46 = por %p44, %p45
      %s47 = ssub.s32 %s13, %s20
      %p48 = scmp.eq.s32.totalorder %s47, 0
      %s50 = sadd.s32 %s49, 1
      %s51 = scalar_select %p48, %s49, %s50
      %p54 = pneg %p48
      %p55 = scmp.eq.s32.totalorder %s13, 1
      %p56 = por %p54, %p55
      %p57 = scmp.ne.s32.totalorder %s49, %s52
      %p58 = scmp.eq.s32.totalorder %s13, 0
      %p59 = por %p57, %p58
      %p60 = scmp.ne.s32.totalorder %s49, %s52
      %p61 = scmp.eq.s32.totalorder %s18, 1
      %p62 = por %p60, %p61
      %p63 = scmp.ne.s32.totalorder %s52, %s53
      %p64 = scmp.eq.s32.totalorder %s18, 0
      %p65 = por %p63, %p64
      %p66 = scmp.ne.s32.totalorder %s52, %s53
      %p67 = scmp.eq.s32.totalorder %s19, 1
      %p68 = por %p66, %p67
      %p70 = scmp.ne.s32.totalorder %s53, %s69
      %p71 = scmp.eq.s32.totalorder %s19, 0
      %p72 = por %p70, %p71
      %s74 = sadd.s32 %s73, 1
      %p77 = scmp.eq.s32.totalorder %s13, 1
      %p78 = scmp.ne.s32.totalorder %s73, %s75
      %p79 = scmp.eq.s32.totalorder %s13, 0
      %p80 = por %p78, %p79
      %p81 = scmp.ne.s32.totalorder %s73, %s75
      %p82 = scmp.eq.s32.totalorder %s18, 1
      %p83 = por %p81, %p82
      %p84 = scmp.ne.s32.totalorder %s75, %s76
      %p85 = scmp.eq.s32.totalorder %s18, 0
      %p86 = por %p84, %p85
      %p87 = scmp.ne.s32.totalorder %s75, %s76
      %p88 = scmp.eq.s32.totalorder %s19, 1
      %p89 = por %p87, %p88
      %p91 = scmp.ne.s32.totalorder %s76, %s90
      %p92 = scmp.eq.s32.totalorder %s19, 0
      %p93 = por %p91, %p92
      %s95 = sadd.s32 %s94, 1
      %p98 = scmp.eq.s32.totalorder %s13, 1
      %p99 = scmp.ne.s32.totalorder %s94, %s96
      %p100 = scmp.eq.s32.totalorder %s13, 0
      %p101 = por %p99, %p100
      %p102 = scmp.ne.s32.totalorder %s94, %s96
      %p103 = scmp.eq.s32.totalorder %s18, 1
      %p104 = por %p102, %p103
      %p105 = scmp.ne.s32.totalorder %s96, %s97
      %p106 = scmp.eq.s32.totalorder %s18, 0
      %p107 = por %p105, %p106
      %p108 = scmp.ne.s32.totalorder %s96, %s97
      %p109 = scmp.eq.s32.totalorder %s19, 1
      %p110 = por %p108, %p109
      %p112 = scmp.ne.s32.totalorder %s97, %s111
      %p113 = scmp.eq.s32.totalorder %s19, 0
      %p114 = por %p112, %p113
      %s115 = ssub.s32 %s13, %s20
      %p116 = scmp.eq.s32.totalorder %s115, 0
      %s118 = sadd.s32 %s117, 1
      %s119 = scalar_select %p116, %s117, %s118
      %p122 = pneg %p116
      %p123 = scmp.eq.s32.totalorder %s13, 1
      %p124 = por %p122, %p123
      %p125 = scmp.ne.s32.totalorder %s117, %s120
      %p126 = scmp.eq.s32.totalorder %s13, 0
      %p127 = por %p125, %p126
      %p128 = scmp.ne.s32.totalorder %s117, %s120
      %p129 = scmp.eq.s32.totalorder %s18, 1
      %p130 = por %p128, %p129
      %p131 = scmp.ne.s32.totalorder %s120, %s121
      %p132 = scmp.eq.s32.totalorder %s18, 0
      %p133 = por %p131, %p132
      %p134 = scmp.ne.s32.totalorder %s120, %s121
      %p135 = scmp.eq.s32.totalorder %s19, 1
      %p136 = por %p134, %p135
      %p138 = scmp.ne.s32.totalorder %s121, %s137
      %p139 = scmp.eq.s32.totalorder %s19, 0
      %p140 = por %p138, %p139
      %p141 = scmp.le.s32.totalorder 1, %s13
      %p142 = scmp.lt.s32.totalorder %s13, 3
      %p143 = pnand %p141, %p142
      %p144 = pneg %p143
      // Predicated region
      $region9: #{tpu_custom_call.1} parent=5 // pred_check
        _
      $region10: #{tpu_custom_call.1} parent=5 // pred_check_branch
        %146 = sbr.rel (%p143) target = $region12
      $region11: #{tpu_custom_call.1} parent=5 // pred_region
        %s147 = ssub.s32 %s13, 1
        // Predicated region
        $region13: #{tpu_custom_call.1} parent=11 // pred_check
          %p148 = pneg %p86
        $region14: #{tpu_custom_call.1} parent=11 // pred_check_branch
          %150 = sbr.rel (%p148) target = $region16
        $region15: #{tpu_custom_call.1} parent=11 // pred_region
          _
        $region16: #{tpu_custom_call.1} parent=11 // pred_fallthru
          _
        // Predicated region
        $region17: #{tpu_custom_call.1} parent=11 // pred_check
          %p151 = pneg %p107
        $region18: #{tpu_custom_call.1} parent=11 // pred_check_branch
          %153 = sbr.rel (%p151) target = $region20
        $region19: #{tpu_custom_call.1} parent=11 // pred_region
          _
        $region20: #{tpu_custom_call.1} parent=11 // pred_fallthru
          _
      $region12: #{tpu_custom_call.1} parent=5 // pred_fallthru
        _
      %p154 = scmp.lt.s32.totalorder %s13, 2
      // Predicated region
      $region21: #{tpu_custom_call.1} parent=5 // pred_check
        %p155 = pneg %p154
      $region22: #{tpu_custom_call.1} parent=5 // pred_check_branch
        %157 = sbr.rel (%p155) target = $region24
      $region23: #{tpu_custom_call.1} parent=5 // pred_region
        // Predicated region
        $region25: #{tpu_custom_call.1} parent=23 // pred_check
          %p158 = pneg %p33
        $region26: #{tpu_custom_call.1} parent=23 // pred_check_branch
          %160 = sbr.rel (%p158) target = $region28
        $region27: #{tpu_custom_call.1} parent=23 // pred_region
          %p161 = scmp.lt.s32.totalorder %s13, 1
          %s162 = scalar_select %p161, %s13, 1
          %s163 = smul.addr %s162, 4
          %s164 = scalar_lea.vmem %s0, %s163
        $region28: #{tpu_custom_call.1} parent=23 // pred_fallthru
          _
        // Predicated region
        $region29: #{tpu_custom_call.1} parent=23 // pred_check
          %p165 = pneg %p59
        $region30: #{tpu_custom_call.1} parent=23 // pred_check_branch
          %167 = sbr.rel (%p165) target = $region32
        $region31: #{tpu_custom_call.1} parent=23 // pred_region
          %p168 = scmp.lt.s32.totalorder %s13, 1
          %s169 = scalar_select %p168, %s13, 1
          %s170 = smul.addr %s169, 4
          %s171 = scalar_lea.vmem %s1, %s170
        $region32: #{tpu_custom_call.1} parent=23 // pred_fallthru
          _
      $region24: #{tpu_custom_call.1} parent=5 // pred_fallthru
        _
      %p172 = scmp.le.s32.totalorder 1, %s13
      %p173 = scmp.lt.s32.totalorder %s13, 3
      %p174 = pnand %p172, %p173
      %p175 = pneg %p174
      // Predicated region
      $region33: #{tpu_custom_call.1} parent=5 // pred_check
        _
      $region34: #{tpu_custom_call.1} parent=5 // pred_check_branch
        %177 = sbr.rel (%p174) target = $region36
      $region35: #{tpu_custom_call.1} parent=5 // pred_region
        %s178 = ssub.s32 %s13, 1
        %p179 = scmp.lt.s32.totalorder %s18, 1
        %s180 = scalar_select %p179, %s18, 1
        %s181 = smul.addr %s180, 4
        %s182 = scalar_lea.vmem %s0, %s181
        %p183 = pneg %p39
        %p184 = pneg %p36
        %p185 = scmp.lt.s32.totalorder %s18, 1
        %s186 = scalar_select %p185, %s18, 1
        %s187 = smul.addr %s186, 4
        %s188 = scalar_lea.vmem %s1, %s187
        %p189 = pneg %p65
        %p190 = pneg %p62
        %p191 = pneg %p86
        %p192 = pneg %p83
        %p193 = pneg %p107
        %p194 = pneg %p104
        %p195 = pneg %p133
        %p196 = pneg %p130
        %s197 = sand.u32 %s120, 1
        %s198 = scalar_lea.sflag [#allocation3], %s197
        %s199 = sand.u32 %s120, 1
        %s200 = smul.addr %s199, 32
        %s201 = scalar_lea.vmem [#allocation2], %s200
        %p202 = scmp.lt.s32.totalorder %s18, 1
        %s203 = scalar_select %p202, %s18, 1
        %s204 = smul.addr %s203, 4
        %s205 = scalar_lea.vmem %s0, %s204
        %p206 = scmp.lt.s32.totalorder %s18, 1
        %s207 = scalar_select %p206, %s18, 1
        %s208 = smul.addr %s207, 4
        %s209 = scalar_lea.vmem %s1, %s208
        %v210 = vld [vmem:[%s205] sm:$0xf]
        %v211 = vld [vmem:[%s209] sm:$0xf]
        %v212 = vld [vmem:[%s2] sm:$0xff]
        %v213 = vld [vmem:[%s2 + $0x8] sm:$0xff]
        %v214 = vld [vmem:[%s2 + $0x10] sm:$0xff]
        %v215 = vld [vmem:[%s2 + $0x18] sm:$0xff]
        %v216 = vld [vmem:[%s3] sm:$0xff]
        %v217 = vld [vmem:[%s3 + $0x8] sm:$0xff]
        %v218 = vld [vmem:[%s3 + $0x10] sm:$0xff]
        %v219 = vld [vmem:[%s3 + $0x18] sm:$0xff]
        %vm220 = vcmask 130048
        %v222 = vsel %vm220, %v210, 0
        %v225 = vsel %vm220, %v211, 0
        %227 = vmatprep.subr.mxu0 0.0
        %228 = vmatpush1.xpose.msra.mxu0 %v225
        %229 = vmatprep.subr.mxu0 0.0
        %230 = vmatpush1.xpose.msra.mxu0 0.0
        %231 = vmatprep.subr.mxu0 0.0
        %232 = vmatpush1.xpose.msra.mxu0 0.0
        %233 = vmatprep.subr.mxu0 0.0
        %234 = vmatpush1.xpose.msra.mxu0 0.0
        %235 = vmatprep.subr.mxu0 0.0
        %236 = vmatpush1.xpose.msra.mxu0 0.0
        %237 = vmatprep.subr.mxu0 0.0
        %238 = vmatpush1.xpose.msra.mxu0 0.0
        %239 = vmatprep.subr.mxu0 0.0
        %240 = vmatpush1.xpose.msra.mxu0 0.0
        %241 = vmatprep.subr.mxu0 0.0
        %242 = vmatpush1.xpose.msra.mxu0 0.0
        %243 = vmatprep.subr.mxu0 0.0
        %244 = vmatpush1.xpose.msra.mxu0 0.0
        %245 = vmatprep.subr.mxu0 0.0
        %246 = vmatpush1.xpose.msra.mxu0 0.0
        %247 = vmatprep.subr.mxu0 0.0
        %248 = vmatpush1.xpose.msra.mxu0 0.0
        %249 = vmatprep.subr.mxu0 0.0
        %250 = vmatpush1.xpose.msra.mxu0 0.0
        %251 = vmatprep.subr.mxu0 0.0
        %252 = vmatpush1.xpose.msra.mxu0 0.0
        %253 = vmatprep.subr.mxu0 0.0
        %254 = vmatpush1.xpose.msra.mxu0 0.0
        %255 = vmatprep.subr.mxu0 0.0
        %256 = vmatpush1.xpose.msra.mxu0 0.0
        %257 = vmatprep.subr.mxu0 0.0
        %258 = vmatpush1.xpose.msra.mxu0 0.0
        %259 = vmatprep.subr.mxu0 0.0
        %260 = vmatpush1.xpose.msra.mxu0 0.0
        %261 = vmatprep.subr.mxu0 0.0
        %262 = vmatpush1.xpose.msra.mxu0 0.0
        %263 = vmatprep.subr.mxu0 0.0
        %264 = vmatpush1.xpose.msra.mxu0 0.0
        %265 = vmatprep.subr.mxu0 0.0
        %266 = vmatpush1.xpose.msra.mxu0 0.0
        %267 = vmatprep.subr.mxu0 0.0
        %268 = vmatpush1.xpose.msra.mxu0 0.0
        %269 = vmatprep.subr.mxu0 0.0
        %270 = vmatpush1.xpose.msra.mxu0 0.0
        %271 = vmatprep.subr.mxu0 0.0
        %272 = vmatpush1.xpose.msra.mxu0 0.0
        %273 = vmatprep.subr.mxu0 0.0
        %274 = vmatpush1.xpose.msra.mxu0 0.0
        %275 = vmatprep.subr.mxu0 0.0
        %276 = vmatpush1.xpose.msra.mxu0 0.0
        %277 = vmatprep.subr.mxu0 0.0
        %278 = vmatpush1.xpose.msra.mxu0 0.0
        %279 = vmatprep.subr.mxu0 0.0
        %280 = vmatpush1.xpose.msra.mxu0 0.0
        %281 = vmatprep.subr.mxu0 0.0
        %282 = vmatpush1.xpose.msra.mxu0 0.0
        %283 = vmatprep.subr.mxu0 0.0
        %284 = vmatpush1.xpose.msra.mxu0 0.0
        %285 = vmatprep.subr.mxu0 0.0
        %286 = vmatpush1.xpose.msra.mxu0 0.0
        %287 = vmatprep.subr.mxu0 0.0
        %288 = vmatpush1.xpose.msra.mxu0 0.0
        %289 = vmatprep.subr.mxu0 0.0
        %290 = vmatpush1.xpose.msra.mxu0 0.0
        %291 = vmatprep.mubr.f32.mxu0 0.0
        %292 = vmatmul.mubr.f32.gmra.mrb[0].mxu0 %v222
        %v293 = vpop.f32.mrb[0].mxu0
        %v294 = vadd.f32 0.0, %v293
        %v295 = vpop.f32.mrb[0].mxu0
        %296 = vdwg.mxu0
        %v297 = vmul.f32 %v294, 0.25
        %vm298 = vcmask 31744
        %v300 = vsel %vm298, %v212, 0
        %v303 = vsel %vm298, %v213, 0
        %v306 = vsel %vm298, %v214, 0
        %v309 = vsel %vm298, %v215, 0
        %vm311 = vcmask 1043456
        %v313 = vsel %vm311, %v297, 0
        %315 = vmatprep.subr.mxu0 0.0
        %316 = vmatpush1.msra.mxu0 %v313
        %317 = vmatprep.subr.mxu0 0.0
        %318 = vmatpush1.msra.mxu0 0.0
        %319 = vmatprep.subr.mxu0 0.0
        %320 = vmatpush1.msra.mxu0 0.0
        %321 = vmatprep.subr.mxu0 0.0
        %322 = vmatpush1.msra.mxu0 0.0
        %323 = vmatprep.subr.mxu0 0.0
        %324 = vmatpush1.msra.mxu0 0.0
        %325 = vmatprep.subr.mxu0 0.0
        %326 = vmatpush1.msra.mxu0 0.0
        %327 = vmatprep.subr.mxu0 0.0
        %328 = vmatpush1.msra.mxu0 0.0
        %329 = vmatprep.subr.mxu0 0.0
        %330 = vmatpush1.msra.mxu0 0.0
        %331 = vmatprep.subr.mxu0 0.0
        %332 = vmatpush1.msra.mxu0 0.0
        %333 = vmatprep.subr.mxu0 0.0
        %334 = vmatpush1.msra.mxu0 0.0
        %335 = vmatprep.subr.mxu0 0.0
        %336 = vmatpush1.msra.mxu0 0.0
        %337 = vmatprep.subr.mxu0 0.0
        %338 = vmatpush1.msra.mxu0 0.0
        %339 = vmatprep.subr.mxu0 0.0
        %340 = vmatpush1.msra.mxu0 0.0
        %341 = vmatprep.subr.mxu0 0.0
        %342 = vmatpush1.msra.mxu0 0.0
        %343 = vmatprep.subr.mxu0 0.0
        %344 = vmatpush1.msra.mxu0 0.0
        %345 = vmatprep.subr.mxu0 0.0
        %346 = vmatpush1.msra.mxu0 0.0
        %347 = vmatprep.subr.mxu0 0.0
        %348 = vmatpush1.msra.mxu0 0.0
        %349 = vmatprep.subr.mxu0 0.0
        %350 = vmatpush1.msra.mxu0 0.0
        %351 = vmatprep.subr.mxu0 0.0
        %352 = vmatpush1.msra.mxu0 0.0
        %353 = vmatprep.subr.mxu0 0.0
        %354 = vmatpush1.msra.mxu0 0.0
        %355 = vmatprep.subr.mxu0 0.0
        %356 = vmatpush1.msra.mxu0 0.0
        %357 = vmatprep.subr.mxu0 0.0
        %358 = vmatpush1.msra.mxu0 0.0
        %359 = vmatprep.subr.mxu0 0.0
        %360 = vmatpush1.msra.mxu0 0.0
        %361 = vmatprep.subr.mxu0 0.0
        %362 = vmatpush1.msra.mxu0 0.0
        %363 = vmatprep.subr.mxu0 0.0
        %364 = vmatpush1.msra.mxu0 0.0
        %365 = vmatprep.subr.mxu0 0.0
        %366 = vmatpush1.msra.mxu0 0.0
        %367 = vmatprep.subr.mxu0 0.0
        %368 = vmatpush1.msra.mxu0 0.0
        %369 = vmatprep.subr.mxu0 0.0
        %370 = vmatpush1.msra.mxu0 0.0
        %371 = vmatprep.subr.mxu0 0.0
        %372 = vmatpush1.msra.mxu0 0.0
        %373 = vmatprep.subr.mxu0 0.0
        %374 = vmatpush1.msra.mxu0 0.0
        %375 = vmatprep.subr.mxu0 0.0
        %376 = vmatpush1.msra.mxu0 0.0
        %377 = vmatprep.subr.mxu0 0.0
        %378 = vmatpush1.msra.mxu0 0.0
        %379 = vmatprep.mubr.f32.mxu0 0.0
        %380 = vmatmul.mubr.f32.gmra.mrb[0].mxu0 %v300
        %v381 = vpop.f32.mrb[0].mxu0
        %v382 = vadd.f32 0.0, %v381
        %v383 = vpop.f32.mrb[0].mxu0
        %384 = vmatprep.mubr.f32.mxu0 0.0
        %385 = vmatmul.mubr.f32.gmra.mrb[0].mxu0 %v303
        %v386 = vpop.f32.mrb[0].mxu0
        %v387 = vadd.f32 0.0, %v386
        %v388 = vpop.f32.mrb[0].mxu0
        %389 = vmatprep.mubr.f32.mxu0 0.0
        %390 = vmatmul.mubr.f32.gmra.mrb[0].mxu0 %v306
        %v391 = vpop.f32.mrb[0].mxu0
        %v392 = vadd.f32 0.0, %v391
        %v393 = vpop.f32.mrb[0].mxu0
        %394 = vmatprep.mubr.f32.mxu0 0.0
        %395 = vmatmul.mubr.f32.gmra.mrb[0].mxu0 %v309
        %v396 = vpop.f32.mrb[0].mxu0
        %v397 = vadd.f32 0.0, %v396
        %v398 = vpop.f32.mrb[0].mxu0
        %399 = vdwg.mxu0
        %v401 = vsel %vm298, %v382, 0
        %v404 = vsel %vm298, %v387, 0
        %v407 = vsel %vm298, %v392, 0
        %v410 = vsel %vm298, %v397, 0
        %v413 = vsel %vm298, %v216, 0
        %v416 = vsel %vm298, %v217, 0
        %v419 = vsel %vm298, %v218, 0
        %v422 = vsel %vm298, %v219, 0
        %424 = vmatprep.subr.mxu0 0.0
        %425 = vmatpush1.xpose.msra.mxu0 %v413
        %426 = vmatprep.subr.mxu0 0.0
        %427 = vmatpush1.xpose.msra.mxu0 %v416
        %428 = vmatprep.subr.mxu0 0.0
        %429 = vmatpush1.xpose.msra.mxu0 %v419
        %430 = vmatprep.subr.mxu0 0.0
        %431 = vmatpush1.xpose.msra.mxu0 %v422
        %432 = vmatprep.subr.mxu0 0.0
        %433 = vmatpush1.xpose.msra.mxu0 0.0
        %434 = vmatprep.subr.mxu0 0.0
        %435 = vmatpush1.xpose.msra.mxu0 0.0
        %436 = vmatprep.subr.mxu0 0.0
        %437 = vmatpush1.xpose.msra.mxu0 0.0
        %438 = vmatprep.subr.mxu0 0.0
        %439 = vmatpush1.xpose.msra.mxu0 0.0
        %440 = vmatprep.subr.mxu0 0.0
        %441 = vmatpush1.xpose.msra.mxu0 0.0
        %442 = vmatprep.subr.mxu0 0.0
        %443 = vmatpush1.xpose.msra.mxu0 0.0
        %444 = vmatprep.subr.mxu0 0.0
        %445 = vmatpush1.xpose.msra.mxu0 0.0
        %446 = vmatprep.subr.mxu0 0.0
        %447 = vmatpush1.xpose.msra.mxu0 0.0
        %448 = vmatprep.subr.mxu0 0.0
        %449 = vmatpush1.xpose.msra.mxu0 0.0
        %450 = vmatprep.subr.mxu0 0.0
        %451 = vmatpush1.xpose.msra.mxu0 0.0
        %452 = vmatprep.subr.mxu0 0.0
        %453 = vmatpush1.xpose.msra.mxu0 0.0
        %454 = vmatprep.subr.mxu0 0.0
        %455 = vmatpush1.xpose.msra.mxu0 0.0
        %456 = vmatprep.subr.mxu0 0.0
        %457 = vmatpush1.xpose.msra.mxu0 0.0
        %458 = vmatprep.subr.mxu0 0.0
        %459 = vmatpush1.xpose.msra.mxu0 0.0
        %460 = vmatprep.subr.mxu0 0.0
        %461 = vmatpush1.xpose.msra.mxu0 0.0
        %462 = vmatprep.subr.mxu0 0.0
        %463 = vmatpush1.xpose.msra.mxu0 0.0
        %464 = vmatprep.subr.mxu0 0.0
        %465 = vmatpush1.xpose.msra.mxu0 0.0
        %466 = vmatprep.subr.mxu0 0.0
        %467 = vmatpush1.xpose.msra.mxu0 0.0
        %468 = vmatprep.subr.mxu0 0.0
        %469 = vmatpush1.xpose.msra.mxu0 0.0
        %470 = vmatprep.subr.mxu0 0.0
        %471 = vmatpush1.xpose.msra.mxu0 0.0
        %472 = vmatprep.subr.mxu0 0.0
        %473 = vmatpush1.xpose.msra.mxu0 0.0
        %474 = vmatprep.subr.mxu0 0.0
        %475 = vmatpush1.xpose.msra.mxu0 0.0
        %476 = vmatprep.subr.mxu0 0.0
        %477 = vmatpush1.xpose.msra.mxu0 0.0
        %478 = vmatprep.subr.mxu0 0.0
        %479 = vmatpush1.xpose.msra.mxu0 0.0
        %480 = vmatprep.subr.mxu0 0.0
        %481 = vmatpush1.xpose.msra.mxu0 0.0
        %482 = vmatprep.subr.mxu0 0.0
        %483 = vmatpush1.xpose.msra.mxu0 0.0
        %484 = vmatprep.subr.mxu0 0.0
        %485 = vmatpush1.xpose.msra.mxu0 0.0
        %486 = vmatprep.subr.mxu0 0.0
        %487 = vmatpush1.xpose.msra.mxu0 0.0
        %488 = vmatprep.mubr.f32.mxu0 0.0
        %489 = vmatmul.mubr.f32.gmra.mrb[0].mxu0 %v401
        %v490 = vpop.f32.mrb[0].mxu0
        %v491 = vadd.f32 0.0, %v490
        %v492 = vpop.f32.mrb[0].mxu0
        %493 = vmatprep.mubr.f32.mxu0 0.0
        %494 = vmatmul.mubr.f32.gmra.mrb[0].mxu0 %v404
        %v495 = vpop.f32.mrb[0].mxu0
        %v496 = vadd.f32 0.0, %v495
        %v497 = vpop.f32.mrb[0].mxu0
        %498 = vmatprep.mubr.f32.mxu0 0.0
        %499 = vmatmul.mubr.f32.gmra.mrb[0].mxu0 %v407
        %v500 = vpop.f32.mrb[0].mxu0
        %v501 = vadd.f32 0.0, %v500
        %v502 = vpop.f32.mrb[0].mxu0
        %503 = vmatprep.mubr.f32.mxu0 0.0
        %504 = vmatmul.mubr.f32.gmra.mrb[0].mxu0 %v410
        %v505 = vpop.f32.mrb[0].mxu0
        %v506 = vadd.f32 0.0, %v505
        %v507 = vpop.f32.mrb[0].mxu0
        %508 = vdwg.mxu0
        %vm509 = vcmask 261120
        %v510 = vsel %vm509, %v491, -inf
        %511 = vmax.xlane.f32.xlu0 %v510
        %v512 = vpop.xlane.xlu0 %511
        %v513 = vsel %vm509, %v496, -inf
        %514 = vmax.xlane.f32.xlu0 %v513
        %v515 = vpop.xlane.xlu0 %514
        %v516 = vsel %vm509, %v501, -inf
        %517 = vmax.xlane.f32.xlu0 %v516
        %v518 = vpop.xlane.xlu0 %517
        %v519 = vsel %vm509, %v506, -inf
        %520 = vmax.xlane.f32.xlu0 %v519
        %v521 = vpop.xlane.xlu0 %520
        %v522 = vsub.f32 %v491, %v512
        %v523 = vsub.f32 %v496, %v515
        %v524 = vsub.f32 %v501, %v518
        %v525 = vsub.f32 %v506, %v521
        %v526 = vmul.f32 %v522, 1.442695
        %v527 = vpow.pop %v526
        %v528 = vmul.f32 %v523, 1.442695
        %v529 = vpow.pop %v528
        %v530 = vmul.f32 %v524, 1.442695
        %v531 = vpow.pop %v530
        %v532 = vmul.f32 %v525, 1.442695
        %v533 = vpow.pop %v532
        %v534 = vsel %vm509, %v527, 0.0
        %535 = vadd.xlane.f32.xlu0 %v534
        %v536 = vpop.xlane.xlu0 %535
        %v537 = vsel %vm509, %v529, 0.0
        %538 = vadd.xlane.f32.xlu0 %v537
        %v539 = vpop.xlane.xlu0 %538
        %v540 = vsel %vm509, %v531, 0.0
        %541 = vadd.xlane.f32.xlu0 %v540
        %v542 = vpop.xlane.xlu0 %541
        %v543 = vsel %vm509, %v533, 0.0
        %544 = vadd.xlane.f32.xlu0 %v543
        %v545 = vpop.xlane.xlu0 %544
        %v546 = vrcp.pop %v536
        %v547 = vrcp.pop %v539
        %v548 = vrcp.pop %v542
        %v549 = vrcp.pop %v545
        %v550 = vmul.f32 %v527, %v546
        %v551 = vmul.f32 %v529, %v547
        %v552 = vmul.f32 %v531, %v548
        %v553 = vmul.f32 %v533, %v549
        %554 = vst.msk [vmem:[%s201] sm:$0xff] %vm509, %v550
        %555 = vst.msk [vmem:[%s201 + $0x8] sm:$0xff] %vm509, %v551
        %556 = vst.msk [vmem:[%s201 + $0x10] sm:$0xff] %vm509, %v552
        %557 = vst.msk [vmem:[%s201 + $0x18] sm:$0xff] %vm509, %v553
        %s558 = sand.u32 %s120, 1
        %s559 = scalar_lea.sflag [#allocation3], %s558
        %s560 = sand.u32 %s120, 1
        %s561 = smul.addr %s560, 32
        %s562 = scalar_lea.vmem [#allocation2], %s561
        // Predicated region
        $region37: #{tpu_custom_call.1} parent=35 // pred_check
          %p563 = pneg %p130
        $region38: #{tpu_custom_call.1} parent=35 // pred_check_branch
          %565 = sbr.rel (%p563) target = $region40
        $region39: #{tpu_custom_call.1} parent=35 // pred_region
          %s567 = ssub.s32 512, 512
          %568 = vsyncadd %s559, %s567
          %s569 = smul.addr %s18, 4
          %s570 = smul.addr %s569, 128
          %s571 = scalar_lea.hbm %s4, %s570
          %s572 = sshll.u32 %s562, 4
          %s573 = int_to_ptr.vmem [resolvable:$true] %s572
          %578 = dma.vmem_to_hbm [thread:$0]  %s573, 512, %s571, %s559, 128, 128, 8
        $region40: #{tpu_custom_call.1} parent=35 // pred_fallthru
          _
      $region36: #{tpu_custom_call.1} parent=5 // pred_fallthru
        _
      %p579 = scmp.le.s32.totalorder 2, %s13
      // Predicated region
      $region41: #{tpu_custom_call.1} parent=5 // pred_check
        %p580 = pneg %p579
      $region42: #{tpu_custom_call.1} parent=5 // pred_check_branch
        %582 = sbr.rel (%p580) target = $region44
      $region43: #{tpu_custom_call.1} parent=5 // pred_region
        %s583 = ssub.s32 %s13, 2
        // Predicated region
        $region45: #{tpu_custom_call.1} parent=43 // pred_check
          %p584 = pneg %p136
        $region46: #{tpu_custom_call.1} parent=43 // pred_check_branch
          %586 = sbr.rel (%p584) target = $region48
        $region47: #{tpu_custom_call.1} parent=43 // pred_region
          %s587 = sand.u32 %s121, 1
          %s588 = scalar_lea.sflag [#allocation3], %s587
          %s589 = sand.u32 %s121, 1
          %s590 = smul.addr %s589, 32
          %s591 = scalar_lea.vmem [#allocation2], %s590
          %592 = dma.done %s588, 512
        $region48: #{tpu_custom_call.1} parent=43 // pred_fallthru
          _
      $region44: #{tpu_custom_call.1} parent=5 // pred_fallthru
        _
    $region6: #{tpu_custom_call.1} parent=1 // loop_footer
      %s17 = sadd.s32 1, %s13
    $region7: #{tpu_custom_call.1} parent=1 // loop_footer_branch
      %12 = sbr.rel target = $region3
    $region8: #{tpu_custom_call.1} parent=1 // loop_exit
      _
    %593 = vsyncpa [#allocation3], 1
    %s594 = scalar_lea.sflag [#allocation3], 1
    %595 = vsyncpa %s594, 1

</llo_original>
